<compile_context>
chip_gen: v5e
topology: v5e:2x2
jax: 0.10.0
libtpu: 0.0.40
codegen_flags: <defaults>
</compile_context>

<pallas_src>
import jax
import jax.numpy as jnp
from jax.experimental import pallas as pl
from jax.experimental.pallas import tpu as pltpu


def _scale_mul_kernel(scale_ref, x_ref, o_ref):
    # scale_ref: (C, 1) VMEM, x_ref / o_ref: (C, HW) VMEM.
    # Implicit lane broadcast of the (C, 1) scale into the VPU multiply.
    o_ref[...] = x_ref[...] * scale_ref[...]


def _broadcast_mul_impl(x42, x37):
    n, c, h, w = x37.shape
    assert n == 1, "kernel layout assumes batch size 1 (as in the reference module)"
    assert x42.shape == (n, c, 1, 1)
    hw = h * w

    x_2d = x37.reshape(c, hw)
    s_2d = x42.reshape(c, 1)

    itemsize = jnp.dtype(x37.dtype).itemsize
    cost = pl.CostEstimate(
        flops=c * hw,                                   # one multiply per element
        transcendentals=0,
        bytes_accessed=2 * c * hw * itemsize + c * itemsize,  # read x + write out + read scale
    )

    out_2d = pl.pallas_call(
        _scale_mul_kernel,
        out_shape=jax.ShapeDtypeStruct((c, hw), x37.dtype),
        # No grid: single invocation, whole arrays resident in VMEM.
        in_specs=[
            pl.BlockSpec(memory_space=pltpu.MemorySpace.VMEM),  # scale (C, 1)
            pl.BlockSpec(memory_space=pltpu.MemorySpace.VMEM),  # activation (C, HW)
        ],
        out_specs=pl.BlockSpec(memory_space=pltpu.MemorySpace.VMEM),
        cost_estimate=cost,
    )(s_2d, x_2d)

    return out_2d.reshape(n, c, h, w)


broadcast_mul = jax.jit(_broadcast_mul_impl)


if __name__ == "__main__":
    key = jax.random.PRNGKey(0)
    k1, k2 = jax.random.split(key)
    # Shapes taken directly from the PyTorch module (already small).
    x37 = jax.random.normal(k1, (1, 96, 14, 14), dtype=jnp.float32)
    x42 = jax.random.normal(k2, (1, 96, 1, 1), dtype=jnp.float32)

    # Reference: plain-JAX broadcasting, identical to PyTorch semantics.
    ref = x42 * x37

    out = broadcast_mul(x42, x37)
    jax.block_until_ready(out)

    assert out.shape == (1, 96, 14, 14)
    assert out.dtype == x37.dtype
    assert jnp.allclose(out, ref, atol=1e-6, rtol=1e-6)

    print("KERNEL_OK")
</pallas_src>

<mosaic_0001>
module attributes {stable_mosaic.version = 11 : i64} {
  func.func @_scale_mul_kernel(%arg0: memref<96x1xf32, #tpu.memory_space<vmem>>, %arg1: memref<96x196xf32, #tpu.memory_space<vmem>>, %arg2: memref<96x196xf32, #tpu.memory_space<vmem>>) attributes {dimension_semantics = [], scalar_prefetch = 0 : i64, scratch_operands = 0 : i64, tpu.core_type = #tpu.core_type<tc>} {
    %c0 = arith.constant 0 : index
    %c0_0 = arith.constant 0 : index
    %0 = vector.load %arg1[%c0, %c0_0] : memref<96x196xf32, #tpu.memory_space<vmem>>, vector<96x196xf32>
    %c0_1 = arith.constant 0 : index
    %c0_2 = arith.constant 0 : index
    %1 = vector.load %arg0[%c0_1, %c0_2] : memref<96x1xf32, #tpu.memory_space<vmem>>, vector<96x1xf32>
    %2 = vector.broadcast %1 : vector<96x1xf32> to vector<96x196xf32>
    %3 = arith.mulf %0, %2 : vector<96x196xf32>
    %c0_3 = arith.constant 0 : index
    %c0_4 = arith.constant 0 : index
    %4 = vector.load %arg2[%c0_3, %c0_4] : memref<96x196xf32, #tpu.memory_space<vmem>>, vector<96x196xf32>
    tpu.vector_store %arg2[%c0_3, %c0_4], %3 {strides = array<i32>} : memref<96x196xf32, #tpu.memory_space<vmem>>, vector<96x196xf32>,
    return
  }
}

</mosaic_0001>

<llo_original>
// kernel: _broadcast_mul_impl.1
$region0: #{_broadcast_mul_impl.1}
  #allocation0 [shape = 'u32[]', space=smem, size = 0x4, offset = 0x4, fixed_abs, tag = 'smem constant byte address 0x4 - core index']
  #allocation1 [shape = 'u32[72,128]{1,0:T(1,128)}', space=vmem, size = 0x9000, scoped, tag = 'internal scratch']
  %s0 = inlined_call_operand.vmem [shape: f32[96,1], index: 0, kind: input, shape index: {}]
  %s1 = inlined_call_operand.vmem [shape: f32[96,196], index: 1, kind: input, shape index: {}]
  %s2 = inlined_call_operand.vmem [shape: f32[96,196], index: 2, kind: output, shape index: {}]
  %s3 = sld [smem:[#allocation0]]
  $region18: #{_broadcast_mul_impl.1} parent=0
    _
  %s5 = ssub.s32 1, %s3
  %s6 = scalar_select 0, %s5, %s3
  // Predicated region
  $region2: #{_broadcast_mul_impl.1} parent=0 // pred_check
    _
  $region3: #{_broadcast_mul_impl.1} parent=0 // pred_check_branch
    %8 = sbr.rel (0) target = $region5
  $region4: #{_broadcast_mul_impl.1} parent=0 // pred_region
    _
  $region5: #{_broadcast_mul_impl.1} parent=0 // pred_fallthru
    _
  // Predicated region
  $region6: #{_broadcast_mul_impl.1} parent=0 // pred_check
    _
  $region7: #{_broadcast_mul_impl.1} parent=0 // pred_check_branch
    %10 = sbr.rel (0) target = $region9
  $region8: #{_broadcast_mul_impl.1} parent=0 // pred_region
    _
  $region9: #{_broadcast_mul_impl.1} parent=0 // pred_fallthru
    _
  %v11 = vld [vmem:[%s1] sm:$0xff]
  %v12 = vld [vmem:[%s1 + $0x8] sm:$0xff]
  %v13 = vld [vmem:[%s1 + $0x10] sm:$0xff]
  %v14 = vld [vmem:[%s1 + $0x18] sm:$0xff]
  %v15 = vld [vmem:[%s1 + $0x20] sm:$0xff]
  %v16 = vld [vmem:[%s1 + $0x28] sm:$0xff]
  %v17 = vld [vmem:[%s1 + $0x30] sm:$0xff]
  %v18 = vld [vmem:[%s1 + $0x38] sm:$0xff]
  %v19 = vld [vmem:[%s1 + $0x40] sm:$0xff]
  %v20 = vld [vmem:[%s1 + $0x48] sm:$0xff]
  %v21 = vld [vmem:[%s1 + $0x50] sm:$0xff]
  %v22 = vld [vmem:[%s1 + $0x58] sm:$0xff]
  %v23 = vld [vmem:[%s1 + $0x60] sm:$0xff]
  %v24 = vld [vmem:[%s1 + $0x68] sm:$0xff]
  %v25 = vld [vmem:[%s1 + $0x70] sm:$0xff]
  %v26 = vld [vmem:[%s1 + $0x78] sm:$0xff]
  %v27 = vld [vmem:[%s1 + $0x80] sm:$0xff]
  %v28 = vld [vmem:[%s1 + $0x88] sm:$0xff]
  %v29 = vld [vmem:[%s1 + $0x90] sm:$0xff]
  %v30 = vld [vmem:[%s1 + $0x98] sm:$0xff]
  %v31 = vld [vmem:[%s1 + $0xa0] sm:$0xff]
  %v32 = vld [vmem:[%s1 + $0xa8] sm:$0xff]
  %v33 = vld [vmem:[%s1 + $0xb0] sm:$0xff]
  %v34 = vld [vmem:[%s1 + $0xb8] sm:$0xff]
  %v35 = vld [vmem:[%s0] sm:$0xff]
  %v36 = vld [vmem:[%s0 + $0x8] sm:$0xff]
  %v37 = vld [vmem:[%s0 + $0x10] sm:$0xff]
  %v38 = vld [vmem:[%s0 + $0x18] sm:$0xff]
  %v39 = vld [vmem:[%s0 + $0x20] sm:$0xff]
  %v40 = vld [vmem:[%s0 + $0x28] sm:$0xff]
  %v41 = vld [vmem:[%s0 + $0x30] sm:$0xff]
  %v42 = vld [vmem:[%s0 + $0x38] sm:$0xff]
  %v43 = vld [vmem:[%s0 + $0x40] sm:$0xff]
  %v44 = vld [vmem:[%s0 + $0x48] sm:$0xff]
  %v45 = vld [vmem:[%s0 + $0x50] sm:$0xff]
  %v46 = vld [vmem:[%s0 + $0x58] sm:$0xff]
  %48 = vset.pattern.permute.xlu0 0
  %49 = vperm.xlu0 %48, %v35
  %v50 = vpop.permute.xlu0 %49
  %53 = vset.pattern.permute.xlu0 0
  %54 = vperm.xlu0 %53, %v36
  %v55 = vpop.permute.xlu0 %54
  %58 = vset.pattern.permute.xlu0 0
  %59 = vperm.xlu0 %58, %v37
  %v60 = vpop.permute.xlu0 %59
  %63 = vset.pattern.permute.xlu0 0
  %64 = vperm.xlu0 %63, %v38
  %v65 = vpop.permute.xlu0 %64
  %68 = vset.pattern.permute.xlu0 0
  %69 = vperm.xlu0 %68, %v39
  %v70 = vpop.permute.xlu0 %69
  %73 = vset.pattern.permute.xlu0 0
  %74 = vperm.xlu0 %73, %v40
  %v75 = vpop.permute.xlu0 %74
  %78 = vset.pattern.permute.xlu0 0
  %79 = vperm.xlu0 %78, %v41
  %v80 = vpop.permute.xlu0 %79
  %83 = vset.pattern.permute.xlu0 0
  %84 = vperm.xlu0 %83, %v42
  %v85 = vpop.permute.xlu0 %84
  %88 = vset.pattern.permute.xlu0 0
  %89 = vperm.xlu0 %88, %v43
  %v90 = vpop.permute.xlu0 %89
  %93 = vset.pattern.permute.xlu0 0
  %94 = vperm.xlu0 %93, %v44
  %v95 = vpop.permute.xlu0 %94
  %98 = vset.pattern.permute.xlu0 0
  %99 = vperm.xlu0 %98, %v45
  %v100 = vpop.permute.xlu0 %99
  %103 = vset.pattern.permute.xlu0 0
  %104 = vperm.xlu0 %103, %v46
  %v105 = vpop.permute.xlu0 %104
  %v107 = vmul.f32 %v11, %v50
  %v108 = vmul.f32 %v12, %v50
  %v109 = vmul.f32 %v13, %v55
  %v110 = vmul.f32 %v14, %v55
  %v111 = vmul.f32 %v15, %v60
  %v112 = vmul.f32 %v16, %v60
  %v113 = vmul.f32 %v17, %v65
  %v114 = vmul.f32 %v18, %v65
  %v115 = vmul.f32 %v19, %v70
  %v116 = vmul.f32 %v20, %v70
  %v117 = vmul.f32 %v21, %v75
  %v118 = vmul.f32 %v22, %v75
  %v119 = vmul.f32 %v23, %v80
  %v120 = vmul.f32 %v24, %v80
  %v121 = vmul.f32 %v25, %v85
  %v122 = vmul.f32 %v26, %v85
  %v123 = vmul.f32 %v27, %v90
  %v124 = vmul.f32 %v28, %v90
  %v125 = vmul.f32 %v29, %v95
  %v126 = vmul.f32 %v30, %v95
  %v127 = vmul.f32 %v31, %v100
  %v128 = vmul.f32 %v32, %v100
  %v129 = vmul.f32 %v33, %v105
  %v130 = vmul.f32 %v34, %v105
  %131 = vst [vmem:[%s2] sm:$0xff] %v107
  %vm132 = vcmask 556032
  %133 = vst.msk [vmem:[%s2 + $0x8] sm:$0xff] %vm132, %v108
  %134 = vst [vmem:[%s2 + $0x10] sm:$0xff] %v109
  %135 = vst.msk [vmem:[%s2 + $0x18] sm:$0xff] %vm132, %v110
  %136 = vst [vmem:[%s2 + $0x20] sm:$0xff] %v111
  %137 = vst.msk [vmem:[%s2 + $0x28] sm:$0xff] %vm132, %v112
  %138 = vst [vmem:[%s2 + $0x30] sm:$0xff] %v113
  %139 = vst.msk [vmem:[%s2 + $0x38] sm:$0xff] %vm132, %v114
  %140 = vst [vmem:[%s2 + $0x40] sm:$0xff] %v115
  %141 = vst.msk [vmem:[%s2 + $0x48] sm:$0xff] %vm132, %v116
  %142 = vst [vmem:[%s2 + $0x50] sm:$0xff] %v117
  %143 = vst.msk [vmem:[%s2 + $0x58] sm:$0xff] %vm132, %v118
  %144 = vst [vmem:[%s2 + $0x60] sm:$0xff] %v119
  %145 = vst.msk [vmem:[%s2 + $0x68] sm:$0xff] %vm132, %v120
  %146 = vst [vmem:[%s2 + $0x70] sm:$0xff] %v121
  %147 = vst.msk [vmem:[%s2 + $0x78] sm:$0xff] %vm132, %v122
  %148 = vst [vmem:[%s2 + $0x80] sm:$0xff] %v123
  %149 = vst.msk [vmem:[%s2 + $0x88] sm:$0xff] %vm132, %v124
  %150 = vst [vmem:[%s2 + $0x90] sm:$0xff] %v125
  %151 = vst.msk [vmem:[%s2 + $0x98] sm:$0xff] %vm132, %v126
  %152 = vst [vmem:[%s2 + $0xa0] sm:$0xff] %v127
  %153 = vst.msk [vmem:[%s2 + $0xa8] sm:$0xff] %vm132, %v128
  %154 = vst [vmem:[%s2 + $0xb0] sm:$0xff] %v129
  %155 = vst.msk [vmem:[%s2 + $0xb8] sm:$0xff] %vm132, %v130
  // Predicated region
  $region10: #{_broadcast_mul_impl.1} parent=0 // pred_check
    _
  $region11: #{_broadcast_mul_impl.1} parent=0 // pred_check_branch
    %157 = sbr.rel (0) target = $region13
  $region12: #{_broadcast_mul_impl.1} parent=0 // pred_region
    _
  $region13: #{_broadcast_mul_impl.1} parent=0 // pred_fallthru
    _
  // Predicated region
  $region14: #{_broadcast_mul_impl.1} parent=0 // pred_check
    _
  $region15: #{_broadcast_mul_impl.1} parent=0 // pred_check_branch
    %159 = sbr.rel (0) target = $region17
  $region16: #{_broadcast_mul_impl.1} parent=0 // pred_region
    _
  $region17: #{_broadcast_mul_impl.1} parent=0 // pred_fallthru
    _

</llo_original>
